<compile_context>
chip_gen: v7x
topology: tpu7x:2x2x1
jax: 0.10.0
libtpu: 0.0.40
codegen_flags: <defaults>
</compile_context>

<pallas_src>
import numpy as np
import jax
import jax.numpy as jnp
from jax import lax
from jax.experimental import pallas as pl
from jax.experimental.pallas import tpu as pltpu

EPS = 1e-5  # nn.BatchNorm2d default eps


# ---------------------------------------------------------------------------
# Pallas kernels
# ---------------------------------------------------------------------------
def _mm_stats_kernel(w_ref, p_ref, y_ref, sum_ref, sq_ref):
    """y = W_T @ patches_T tile (stored bf16); accumulate f32 sum / sumsq over M."""
    @pl.when(pl.program_id(1) == 0)
    def _():
        sum_ref[...] = jnp.zeros_like(sum_ref)
        sq_ref[...] = jnp.zeros_like(sq_ref)

    y = jnp.dot(w_ref[...], p_ref[...], preferred_element_type=jnp.float32)
    y_ref[...] = y.astype(y_ref.dtype)                       # bf16 store
    sum_ref[...] += jnp.sum(y, axis=1, keepdims=True)[None]  # f32 stats from f32 acc
    sq_ref[...] += jnp.sum(y * y, axis=1, keepdims=True)[None]


def _mm_stats_fused_kernel(w_ref, p_ref, ws_ref, xs_ref,
                           y_ref, sum_ref, sq_ref, ssum_ref, ssq_ref):
    """conv2 3x3 matmul (+stats) plus 1x1 shortcut STATS ONLY (result discarded)."""
    @pl.when(pl.program_id(1) == 0)
    def _():
        sum_ref[...] = jnp.zeros_like(sum_ref)
        sq_ref[...] = jnp.zeros_like(sq_ref)
        ssum_ref[...] = jnp.zeros_like(ssum_ref)
        ssq_ref[...] = jnp.zeros_like(ssq_ref)

    y = jnp.dot(w_ref[...], p_ref[...], preferred_element_type=jnp.float32)
    y_ref[...] = y.astype(y_ref.dtype)
    sum_ref[...] += jnp.sum(y, axis=1, keepdims=True)[None]
    sq_ref[...] += jnp.sum(y * y, axis=1, keepdims=True)[None]

    ys = jnp.dot(ws_ref[...], xs_ref[...], preferred_element_type=jnp.float32)
    ssum_ref[...] += jnp.sum(ys, axis=1, keepdims=True)[None]
    ssq_ref[...] += jnp.sum(ys * ys, axis=1, keepdims=True)[None]


def _bn_relu_kernel(y_ref, scale_ref, shift_ref, o_ref):
    """out = relu(bn(y)) emitted in bf16 (conv1 epilogue, feeds conv2 MXU)."""
    o = y_ref[...].astype(jnp.float32) * scale_ref[...] + shift_ref[...]
    o_ref[...] = jnp.maximum(o, 0.0).astype(o_ref.dtype)


def _bn_add_relu_kernel(y_ref, scale_ref, shift_ref, res_ref, pre_ref, relu_ref):
    """pre = bn(y) + residual ; relu(pre)  (conv2 epilogue, identity shortcut)."""
    pre = (y_ref[...].astype(jnp.float32) * scale_ref[...] + shift_ref[...]
           + res_ref[...])
    pre_ref[...] = pre
    relu_ref[...] = jnp.maximum(pre, 0.0)


def _bn_scconv_add_relu_kernel(y_ref, scale_ref, shift_ref,
                               ws_ref, xs_ref, sscale_ref, sshift_ref,
                               pre_ref, relu_ref):
    """pre = bn2(y) + bn_sc(Ws @ xs) ; relu(pre).  1x1 shortcut recomputed here."""
    ysc = jnp.dot(ws_ref[...], xs_ref[...], preferred_element_type=jnp.float32)
    pre = (y_ref[...].astype(jnp.float32) * scale_ref[...] + shift_ref[...]
           + ysc * sscale_ref[...] + sshift_ref[...])
    pre_ref[...] = pre
    relu_ref[...] = jnp.maximum(pre, 0.0)


# ---------------------------------------------------------------------------
# pallas_call wrappers
# ---------------------------------------------------------------------------
def _cparams(sems, vmem_limit):
    return pltpu.CompilerParams(dimension_semantics=sems,
                                vmem_limit_bytes=int(vmem_limit))


def _tile_spec_1d(c, tile_m):
    return pl.BlockSpec((c, tile_m), lambda i: (0, i))


def _full_spec_1d(shape):
    return pl.BlockSpec(shape, lambda i: (0,) * len(shape))


def matmul_stats(w_t, p_t, tile_m, n_par, store_dtype, vmem_limit):
    cout, k = w_t.shape
    _, m_pad = p_t.shape
    num_tiles = m_pad // tile_m
    n_inner = num_tiles // n_par

    tile2 = lambda c: pl.BlockSpec((c, tile_m), lambda cp, t: (0, cp * n_inner + t))
    full2 = lambda s: pl.BlockSpec(s, lambda cp, t: (0,) * len(s))
    stats2 = pl.BlockSpec((1, cout, 1), lambda cp, t: (cp, 0, 0))

    y, ps, pq = pl.pallas_call(
        _mm_stats_kernel,
        grid=(n_par, n_inner),
        in_specs=[full2((cout, k)), tile2(k)],
        out_specs=[tile2(cout), stats2, stats2],
        out_shape=[jax.ShapeDtypeStruct((cout, m_pad), store_dtype),
                   jax.ShapeDtypeStruct((n_par, cout, 1), jnp.float32),
                   jax.ShapeDtypeStruct((n_par, cout, 1), jnp.float32)],
        compiler_params=_cparams(("parallel", "arbitrary"), vmem_limit),
    )(w_t, p_t)
    return y, jnp.sum(ps, axis=0), jnp.sum(pq, axis=0)


def matmul_stats_fused(w_t, p_t, ws_t, xs_t, tile_m, n_par, store_dtype, vmem_limit):
    cout, k = w_t.shape
    _, m_pad = p_t.shape
    ks = ws_t.shape[1]
    num_tiles = m_pad // tile_m
    n_inner = num_tiles // n_par

    tile2 = lambda c: pl.BlockSpec((c, tile_m), lambda cp, t: (0, cp * n_inner + t))
    full2 = lambda s: pl.BlockSpec(s, lambda cp, t: (0,) * len(s))
    stats2 = pl.BlockSpec((1, cout, 1), lambda cp, t: (cp, 0, 0))

    y, ps, pq, pss, psq = pl.pallas_call(
        _mm_stats_fused_kernel,
        grid=(n_par, n_inner),
        in_specs=[full2((cout, k)), tile2(k), full2((cout, ks)), tile2(ks)],
        out_specs=[tile2(cout), stats2, stats2, stats2, stats2],
        out_shape=[jax.ShapeDtypeStruct((cout, m_pad), store_dtype),
                   jax.ShapeDtypeStruct((n_par, cout, 1), jnp.float32),
                   jax.ShapeDtypeStruct((n_par, cout, 1), jnp.float32),
                   jax.ShapeDtypeStruct((n_par, cout, 1), jnp.float32),
                   jax.ShapeDtypeStruct((n_par, cout, 1), jnp.float32)],
        compiler_params=_cparams(("parallel", "arbitrary"), vmem_limit),
    )(w_t, p_t, ws_t, xs_t)
    return (y, jnp.sum(ps, axis=0), jnp.sum(pq, axis=0),
            jnp.sum(pss, axis=0), jnp.sum(psq, axis=0))


def bn_relu(y, scale, shift, tile_m, out_dtype, vmem_limit):
    cout, m_pad = y.shape
    return pl.pallas_call(
        _bn_relu_kernel,
        grid=(m_pad // tile_m,),
        in_specs=[_tile_spec_1d(cout, tile_m),
                  _full_spec_1d((cout, 1)), _full_spec_1d((cout, 1))],
        out_specs=_tile_spec_1d(cout, tile_m),
        out_shape=jax.ShapeDtypeStruct((cout, m_pad), out_dtype),
        compiler_params=_cparams(("parallel",), vmem_limit),
    )(y, scale, shift)


def bn_add_relu(y, scale, shift, res, tile_m, vmem_limit):
    cout, m_pad = y.shape
    return pl.pallas_call(
        _bn_add_relu_kernel,
        grid=(m_pad // tile_m,),
        in_specs=[_tile_spec_1d(cout, tile_m),
                  _full_spec_1d((cout, 1)), _full_spec_1d((cout, 1)),
                  _tile_spec_1d(cout, tile_m)],
        out_specs=[_tile_spec_1d(cout, tile_m), _tile_spec_1d(cout, tile_m)],
        out_shape=[jax.ShapeDtypeStruct((cout, m_pad), jnp.float32),
                   jax.ShapeDtypeStruct((cout, m_pad), jnp.float32)],
        compiler_params=_cparams(("parallel",), vmem_limit),
    )(y, scale, shift, res)


def bn_scconv_add_relu(y, scale, shift, ws_t, xs_t, sscale, sshift, tile_m, vmem_limit):
    cout, m_pad = y.shape
    ks = ws_t.shape[1]
    return pl.pallas_call(
        _bn_scconv_add_relu_kernel,
        grid=(m_pad // tile_m,),
        in_specs=[_tile_spec_1d(cout, tile_m),
                  _full_spec_1d((cout, 1)), _full_spec_1d((cout, 1)),
                  _full_spec_1d((cout, ks)), _tile_spec_1d(ks, tile_m),
                  _full_spec_1d((cout, 1)), _full_spec_1d((cout, 1))],
        out_specs=[_tile_spec_1d(cout, tile_m), _tile_spec_1d(cout, tile_m)],
        out_shape=[jax.ShapeDtypeStruct((cout, m_pad), jnp.float32),
                   jax.ShapeDtypeStruct((cout, m_pad), jnp.float32)],
        compiler_params=_cparams(("parallel",), vmem_limit),
    )(y, scale, shift, ws_t, xs_t, sscale, sshift)


# ---------------------------------------------------------------------------
# plain-JAX glue: transposed im2col, weight layout, BN affine, sizing
# ---------------------------------------------------------------------------
def _round_up(x, m):
    return (x + m - 1) // m * m


def _pad_axis(a, axis, target):
    if a.shape[axis] == target:
        return a
    pads = [(0, 0)] * a.ndim
    pads[axis] = (0, target - a.shape[axis])
    return jnp.pad(a, pads)


def _k_pad(k):
    """Pad contraction dim to 128 lanes only if the HBM overhead is <= 12.5%."""
    k128 = _round_up(k, 128)
    return k128 if (k128 - k) * 8 <= k else _round_up(k, 16)


def _vmem_budget_bytes():
    """Use at most half of physical VMEM (v7x has 64 MiB, v5e/v6e 128 MiB)."""
    try:
        phys = int(pltpu.get_tpu_info().vmem_capacity_bytes)
    except Exception:
        phys = 64 * 1024 * 1024
    return max(16 * 1024 * 1024, min(phys // 2, 96 * 1024 * 1024))


def _choose_tile_m(m, cout, k_pad, ks_pad, budget):
    """Largest M tile whose (double-buffered) working set fits the VMEM budget."""
    m_cap = _round_up(m, 128)
    resident = 2 * 2 * cout * (k_pad + max(ks_pad, 1))      # bf16 weights
    per_col = (2 * 2 * (k_pad + ks_pad)                     # bf16 patch / xs tiles x2
               + 2 * 2 * cout                               # bf16 y tile x2
               + 2 * 2 * 4 * cout)                          # f32 pre/relu epilogue tiles x2
    for cand in (1024, 512, 256):
        if cand <= m_cap and resident + cand * per_col <= budget:
            return cand
    return 128


def _im2col_t(x_cnhw, ksize, stride, pad, m_pad):
    """Channel-first im2col producing patches_T of shape (k*k*C, m_pad)."""
    c, n, h, w = x_cnhw.shape
    xp = jnp.pad(x_cnhw, ((0, 0), (0, 0), (pad, pad), (pad, pad)))
    ho = (h + 2 * pad - ksize) // stride + 1
    wo = (w + 2 * pad - ksize) // stride + 1
    rows = []
    for di in range(ksize):
        for dj in range(ksize):
            sl = xp[:, :, di:di + stride * ho:stride, dj:dj + stride * wo:stride]
            rows.append(sl.reshape(c, n * ho * wo))
    p = jnp.concatenate(rows, axis=0)            # K index = (di*k + dj)*C + c
    return _pad_axis(p, 1, m_pad)


def _w_to_mat_t(w_oihw):
    """OIHW -> (Cout, kh*kw*Cin), K ordered as (di, dj, c) to match _im2col_t."""
    cout, cin, kh, kw = w_oihw.shape
    return jnp.transpose(w_oihw, (0, 2, 3, 1)).reshape(cout, kh * kw * cin)


def _bn_affine(s, sq, m_true, gamma, beta):
    """Fold batch-stat BatchNorm into per-channel scale/shift (biased variance)."""
    # TODO(synk): E[y^2]-E[y]^2 can cancel for large-mean channels; a centered
    # second pass would be more robust on real data.
    mean = s[:, 0] / m_true
    var = jnp.maximum(sq[:, 0] / m_true - mean * mean, 0.0)
    scale = gamma * lax.rsqrt(var + EPS)
    shift = beta - mean * scale
    return (scale.reshape(-1, 1).astype(jnp.float32),
            shift.reshape(-1, 1).astype(jnp.float32))


def _prep_w(w_oihw, k_pad, dtype):
    return _pad_axis(_w_to_mat_t(w_oihw), 1, k_pad).astype(dtype)


# ---------------------------------------------------------------------------
# BasicBlockQuant forward
# ---------------------------------------------------------------------------
def basic_block_quant_forward(x_tuple, params, iden="na", stride=1,
                              tile_m=None, compute_dtype=jnp.bfloat16,
                              store_dtype=jnp.bfloat16):
    x_nchw = x_tuple[0]                                  # forward does x = x[0]
    n, cin, h, w = x_nchw.shape
    planes = params["w1"].shape[0]
    has_sc_conv = (stride != 1) or (cin != planes)

    ho = (h + 2 - 3) // stride + 1                       # 3x3, pad=1
    wo = (w + 2 - 3) // stride + 1
    m = n * ho * wo

    k1p = _k_pad(9 * cin)
    k2p = _k_pad(9 * planes)
    ksp = _k_pad(cin) if has_sc_conv else 0

    budget = _vmem_budget_bytes()
    if tile_m is None:
        tile_m = _choose_tile_m(m, planes, max(k1p, k2p), ksp, budget)
    tile_m = min(tile_m, _round_up(m, 128))
    m_pad = _round_up(m, tile_m)
    num_tiles = m_pad // tile_m
    n_par = 2 if num_tiles % 2 == 0 else 1               # 2 TC shards on v7x

    x_cnhw = jnp.transpose(x_nchw, (1, 0, 2, 3))         # (Cin, N, H, W)
    x_c = x_cnhw.astype(compute_dtype)                   # bf16 conv operand (as ref)

    results = {}

    # --- conv1 (3x3, stride, pad=1) + bn1 + relu -----------------------------
    w1_t = _prep_w(params["w1"], k1p, compute_dtype)
    p1 = _pad_axis(_im2col_t(x_c, 3, stride, 1, m_pad), 0, k1p)
    y1, s1, q1 = matmul_stats(w1_t, p1, tile_m, n_par, store_dtype, budget)
    sc1, sh1 = _bn_affine(s1, q1, m, params["g1"], params["b1"])
    out1 = bn_relu(y1, sc1, sh1, tile_m, compute_dtype, budget)   # (planes, m_pad) bf16

    out1_cnhw = out1[:, :m].reshape(planes, n, ho, wo)
    results[str(iden) + "0"] = jnp.transpose(out1_cnhw, (1, 0, 2, 3)).astype(jnp.float32)

    # --- conv2 (3x3, 1, pad=1) + bn2, shortcut stats fused, residual, relu ---
    w2_t = _prep_w(params["w2"], k2p, compute_dtype)
    p2 = _pad_axis(_im2col_t(out1_cnhw, 3, 1, 1, m_pad), 0, k2p)

    if has_sc_conv:
        # downsample shortcut: 1x1 conv (stride) + BN.  Pass 1 only accumulates its
        # BN stats; the (cheap) 1x1 matmul itself is recomputed in the epilogue.
        xs = x_c[:, :, ::stride, ::stride].reshape(cin, m)
        xs = _pad_axis(_pad_axis(xs, 1, m_pad), 0, ksp)
        ws_t = _pad_axis(params["ws"].reshape(planes, cin), 1, ksp).astype(compute_dtype)
        y2, s2, q2, ss, qs = matmul_stats_fused(
            w2_t, p2, ws_t, xs, tile_m, n_par, store_dtype, budget)
        sc2, sh2 = _bn_affine(s2, q2, m, params["g2"], params["b2"])
        scs, shs = _bn_affine(ss, qs, m, params["gs"], params["bs"])
        pre, out = bn_scconv_add_relu(y2, sc2, sh2, ws_t, xs, scs, shs, tile_m, budget)
    else:
        # identity shortcut: residual is x itself (kept f32 for fidelity)
        y2, s2, q2 = matmul_stats(w2_t, p2, tile_m, n_par, store_dtype, budget)
        sc2, sh2 = _bn_affine(s2, q2, m, params["g2"], params["b2"])
        res = _pad_axis(x_cnhw.reshape(cin, m), 1, m_pad).astype(jnp.float32)
        pre, out = bn_add_relu(y2, sc2, sh2, res, tile_m, budget)

    # PyTorch's `out += shortcut(x)` is in-place, so results[id+'1'] aliases the
    # post-add (pre-ReLU) tensor; we replicate that observable value here.
    results[str(iden) + "1"] = jnp.transpose(pre[:, :m].reshape(planes, n, ho, wo), (1, 0, 2, 3))
    out_nchw = jnp.transpose(out[:, :m].reshape(planes, n, ho, wo), (1, 0, 2, 3))
    results[str(iden) + "2"] = out_nchw
    return out_nchw, results


# ---------------------------------------------------------------------------
# Pure-JAX reference (mirrors the bf16 conv-input cast; BN/epilogue in f32)
# ---------------------------------------------------------------------------
def _ref_forward(x, params, stride, compute_dtype=jnp.bfloat16):
    def conv(inp, wgt, s, p):
        return lax.conv_general_dilated(
            inp.astype(compute_dtype), wgt.astype(compute_dtype),
            (s, s), [(p, p), (p, p)],
            dimension_numbers=("NCHW", "OIHW", "NCHW"),
            preferred_element_type=jnp.float32)

    def bn(y, g, b):
        mean = jnp.mean(y, axis=(0, 2, 3), keepdims=True)
        var = jnp.mean((y - mean) ** 2, axis=(0, 2, 3), keepdims=True)
        return (y - mean) * lax.rsqrt(var + EPS) * g.reshape(1, -1, 1, 1) + b.reshape(1, -1, 1, 1)

    out = jax.nn.relu(bn(conv(x, params["w1"], stride, 1), params["g1"], params["b1"]))
    out = bn(conv(out, params["w2"], 1, 1), params["g2"], params["b2"])
    if stride != 1 or x.shape[1] != params["w1"].shape[0]:
        sc = bn(conv(x, params["ws"], stride, 0), params["gs"], params["bs"])
    else:
        sc = x
    return jax.nn.relu(out + sc)


# ---------------------------------------------------------------------------
if __name__ == "__main__":
    key = jax.random.PRNGKey(0)
    ks = jax.random.split(key, 16)

    def make_params(in_planes, planes, with_shortcut, keys):
        p = {
            "w1": jax.random.normal(keys[0], (planes, in_planes, 3, 3), jnp.float32) * 0.2,
            "w2": jax.random.normal(keys[1], (planes, planes, 3, 3), jnp.float32) * 0.2,
            "g1": 1.0 + 0.1 * jax.random.normal(keys[2], (planes,), jnp.float32),
            "b1": 0.1 * jax.random.normal(keys[3], (planes,), jnp.float32),
            "g2": 1.0 + 0.1 * jax.random.normal(keys[4], (planes,), jnp.float32),
            "b2": 0.1 * jax.random.normal(keys[5], (planes,), jnp.float32),
        }
        if with_shortcut:
            p["ws"] = jax.random.normal(keys[6], (planes, in_planes, 1, 1), jnp.float32) * 0.2
            p["gs"] = 1.0 + 0.1 * jax.random.normal(keys[7], (planes,), jnp.float32)
            p["bs"] = 0.1 * jax.random.normal(keys[8], (planes,), jnp.float32)
        return p

    N, H, W = 2, 16, 16
    MAX_TOL, MEAN_TOL = 5e-2, 1e-2   # bf16 MXU operands + bf16 intermediate stores

    # Case 1: downsample block (stride=2, in_planes != planes) -> conv shortcut
    in_planes, planes, stride = 4, 8, 2
    params = make_params(in_planes, planes, True, ks[:9])
    x = jax.random.normal(ks[9], (N, in_planes, H, W), jnp.float32)
    out, results = basic_block_quant_forward((x,), params, iden="blk0", stride=stride)
    out = jax.block_until_ready(out)
    assert out.shape == (N, planes, H // stride, W // stride), out.shape
    assert set(results.keys()) == {"blk00", "blk01", "blk02"}
    ref = np.asarray(_ref_forward(x, params, stride))
    d = np.abs(np.asarray(out) - ref)
    assert float(d.max()) < MAX_TOL, f"downsample max diff {float(d.max())}"
    assert float(d.mean()) < MEAN_TOL, f"downsample mean diff {float(d.mean())}"

    # Case 2: identity block (stride=1, in_planes == planes) -> identity shortcut
    # (tile_m=128 forces a multi-tile grid and the 2-way parallel stats split)
    params2 = make_params(8, 8, False, ks[10:16])
    x2 = jax.random.normal(ks[9], (N, 8, H, W), jnp.float32)
    out2, results2 = basic_block_quant_forward((x2,), params2, iden="blk1", stride=1,
                                               tile_m=128)
    out2 = jax.block_until_ready(out2)
    assert out2.shape == (N, 8, H, W), out2.shape
    assert set(results2.keys()) == {"blk10", "blk11", "blk12"}
    ref2 = np.asarray(_ref_forward(x2, params2, 1))
    d2 = np.abs(np.asarray(out2) - ref2)
    assert float(d2.max()) < MAX_TOL, f"identity max diff {float(d2.max())}"
    assert float(d2.mean()) < MEAN_TOL, f"identity mean diff {float(d2.mean())}"

    print("KERNEL_OK")
</pallas_src>

<mosaic_0001>
module attributes {stable_mosaic.version = 11 : i64} {
  func.func @_mm_stats_kernel(%arg0: i32, %arg1: i32, %arg2: memref<8x48xbf16, #tpu.memory_space<vmem>>, %arg3: memref<48x128xbf16, #tpu.memory_space<vmem>>, %arg4: memref<8x128xbf16, #tpu.memory_space<vmem>>, %arg5: memref<1x8x1xf32, #tpu.memory_space<vmem>>, %arg6: memref<1x8x1xf32, #tpu.memory_space<vmem>>) attributes {dimension_semantics = [#tpu.dimension_semantics<parallel>, #tpu.dimension_semantics<arbitrary>], iteration_bounds = array<i64: 1, 1>, scalar_prefetch = 0 : i64, scratch_operands = 0 : i64, tpu.core_type = #tpu.core_type<tc>, window_params = [{pipeline_mode = #tpu.pipeline_mode<synchronous>, transform_indices = @transform_0, window_bounds = array<i64: 8, 48>}, {transform_indices = @transform_1, window_bounds = array<i64: 48, 128>}, {transform_indices = @transform_2, window_bounds = array<i64: 8, 128>}, {transform_indices = @transform_3, window_bounds = array<i64: 1, 8, 1>}, {transform_indices = @transform_4, window_bounds = array<i64: 1, 8, 1>}]} {
    %c0_i32 = arith.constant 0 : i32
    %0 = arith.cmpi eq, %arg1, %c0_i32 : i32
    %1 = arith.extui %0 : i1 to i32
    %c0_i32_0 = arith.constant 0 : i32
    %2 = arith.cmpi ne, %1, %c0_i32_0 : i32
    scf.if %2 {
      %cst_20 = arith.constant 0.000000e+00 : f32
      %21 = vector.broadcast %cst_20 : f32 to vector<1x8x1xf32>
      %c0_21 = arith.constant 0 : index
      %c0_22 = arith.constant 0 : index
      %c0_23 = arith.constant 0 : index
      %22 = vector.load %arg5[%c0_21, %c0_22, %c0_23] : memref<1x8x1xf32, #tpu.memory_space<vmem>>, vector<1x8x1xf32>
      tpu.vector_store %arg5[%c0_21, %c0_22, %c0_23], %21 {strides = array<i32>} : memref<1x8x1xf32, #tpu.memory_space<vmem>>, vector<1x8x1xf32>,
      %cst_24 = arith.constant 0.000000e+00 : f32
      %23 = vector.broadcast %cst_24 : f32 to vector<1x8x1xf32>
      %c0_25 = arith.constant 0 : index
      %c0_26 = arith.constant 0 : index
      %c0_27 = arith.constant 0 : index
      %24 = vector.load %arg6[%c0_25, %c0_26, %c0_27] : memref<1x8x1xf32, #tpu.memory_space<vmem>>, vector<1x8x1xf32>
      tpu.vector_store %arg6[%c0_25, %c0_26, %c0_27], %23 {strides = array<i32>} : memref<1x8x1xf32, #tpu.memory_space<vmem>>, vector<1x8x1xf32>,
    } else {
    }
    %c0 = arith.constant 0 : index
    %c0_1 = arith.constant 0 : index
    %3 = vector.load %arg2[%c0, %c0_1] : memref<8x48xbf16, #tpu.memory_space<vmem>>, vector<8x48xbf16>
    %c0_2 = arith.constant 0 : index
    %c0_3 = arith.constant 0 : index
    %4 = vector.load %arg3[%c0_2, %c0_3] : memref<48x128xbf16, #tpu.memory_space<vmem>>, vector<48x128xbf16>
    %cst = arith.constant dense<0.000000e+00> : vector<8x128xf32>
    %5 = tpu.matmul %3, %4, %cst {dimension_numbers = #tpu.dot_dimension_numbers<[1], [0], [0], [1], [0, 0, 1, 1], [], []>} : vector<8x48xbf16>, vector<48x128xbf16>, vector<8x128xf32> -> vector<8x128xf32>
    %6 = arith.truncf %5 : vector<8x128xf32> to vector<8x128xbf16>
    %c0_4 = arith.constant 0 : index
    %c0_5 = arith.constant 0 : index
    %7 = vector.load %arg4[%c0_4, %c0_5] : memref<8x128xbf16, #tpu.memory_space<vmem>>, vector<8x128xbf16>
    tpu.vector_store %arg4[%c0_4, %c0_5], %6 {strides = array<i32>} : memref<8x128xbf16, #tpu.memory_space<vmem>>, vector<8x128xbf16>,
    %c0_6 = arith.constant 0 : index
    %c0_7 = arith.constant 0 : index
    %c0_8 = arith.constant 0 : index
    %8 = vector.load %arg5[%c0_6, %c0_7, %c0_8] : memref<1x8x1xf32, #tpu.memory_space<vmem>>, vector<1x8x1xf32>
    %cst_9 = arith.constant dense<0.000000e+00> : vector<8xf32>
    %9 = vector.multi_reduction <add>, %5, %cst_9 [1] : vector<8x128xf32> to vector<8xf32>
    %10 = vector.shape_cast %9 : vector<8xf32> to vector<8x1xf32>
    %11 = vector.shape_cast %10 : vector<8x1xf32> to vector<1x8x1xf32>
    %12 = arith.addf %8, %11 : vector<1x8x1xf32>
    %c0_10 = arith.constant 0 : index
    %c0_11 = arith.constant 0 : index
    %c0_12 = arith.constant 0 : index
    %13 = vector.load %arg5[%c0_10, %c0_11, %c0_12] : memref<1x8x1xf32, #tpu.memory_space<vmem>>, vector<1x8x1xf32>
    tpu.vector_store %arg5[%c0_10, %c0_11, %c0_12], %12 {strides = array<i32>} : memref<1x8x1xf32, #tpu.memory_space<vmem>>, vector<1x8x1xf32>,
    %c0_13 = arith.constant 0 : index
    %c0_14 = arith.constant 0 : index
    %c0_15 = arith.constant 0 : index
    %14 = vector.load %arg6[%c0_13, %c0_14, %c0_15] : memref<1x8x1xf32, #tpu.memory_space<vmem>>, vector<1x8x1xf32>
    %15 = arith.mulf %5, %5 : vector<8x128xf32>
    %cst_16 = arith.constant dense<0.000000e+00> : vector<8xf32>
    %16 = vector.multi_reduction <add>, %15, %cst_16 [1] : vector<8x128xf32> to vector<8xf32>
    %17 = vector.shape_cast %16 : vector<8xf32> to vector<8x1xf32>
    %18 = vector.shape_cast %17 : vector<8x1xf32> to vector<1x8x1xf32>
    %19 = arith.addf %14, %18 : vector<1x8x1xf32>
    %c0_17 = arith.constant 0 : index
    %c0_18 = arith.constant 0 : index
    %c0_19 = arith.constant 0 : index
    %20 = vector.load %arg6[%c0_17, %c0_18, %c0_19] : memref<1x8x1xf32, #tpu.memory_space<vmem>>, vector<1x8x1xf32>
    tpu.vector_store %arg6[%c0_17, %c0_18, %c0_19], %19 {strides = array<i32>} : memref<1x8x1xf32, #tpu.memory_space<vmem>>, vector<1x8x1xf32>,
    return
  }
  func.func @transform_0(%arg0: i32, %arg1: i32) -> (i32, i32) {
    %c0_i32 = arith.constant 0 : i32
    %c0_i32_0 = arith.constant 0 : i32
    %c0_i32_1 = arith.constant 0 : i32
    return %c0_i32, %c0_i32_0 : i32, i32
  }
  func.func @transform_1(%arg0: i32, %arg1: i32) -> (i32, i32) {
    %c1_i32 = arith.constant 1 : i32
    %0 = arith.muli %arg0, %c1_i32 : i32
    %1 = arith.addi %0, %arg1 : i32
    %c0_i32 = arith.constant 0 : i32
    %c0_i32_0 = arith.constant 0 : i32
    return %c0_i32, %1 : i32, i32
  }
  func.func @transform_2(%arg0: i32, %arg1: i32) -> (i32, i32) {
    %c1_i32 = arith.constant 1 : i32
    %0 = arith.muli %arg0, %c1_i32 : i32
    %1 = arith.addi %0, %arg1 : i32
    %c0_i32 = arith.constant 0 : i32
    %c0_i32_0 = arith.constant 0 : i32
    return %c0_i32, %1 : i32, i32
  }
  func.func @transform_3(%arg0: i32, %arg1: i32) -> (i32, i32, i32) {
    %c0_i32 = arith.constant 0 : i32
    %c0_i32_0 = arith.constant 0 : i32
    %c0_i32_1 = arith.constant 0 : i32
    return %arg0, %c0_i32, %c0_i32_0 : i32, i32, i32
  }
  func.func @transform_4(%arg0: i32, %arg1: i32) -> (i32, i32, i32) {
    %c0_i32 = arith.constant 0 : i32
    %c0_i32_0 = arith.constant 0 : i32
    %c0_i32_1 = arith.constant 0 : i32
    return %arg0, %c0_i32, %c0_i32_0 : i32, i32, i32
  }
}

</mosaic_0001>

<llo_original>
// kernel: tpu_custom_call.1
$region0: #{tpu_custom_call.1}
  #allocation0 [shape = 'u32[]', space=smem, size = 0x4, offset = 0x4, fixed_abs, tag = 'smem constant byte address 0x4 - core index']
  #allocation1 [shape = 'u32[144,128]{1,0:T(1,128)}', space=vmem, size = 0x12000, scoped, tag = 'internal scratch']
  %s0 = inlined_call_operand.hbm [shape: bf16[8,48], index: 0, kind: input, shape index: {}]
  %s1 = inlined_call_operand.hbm [shape: bf16[48,128], index: 1, kind: input, shape index: {}]
  %s2 = inlined_call_operand.hbm [shape: bf16[8,128], index: 2, kind: output, shape index: {0}]
  %s3 = inlined_call_operand.vmem [shape: f32[1,8,1], index: 3, kind: output, shape index: {1}]
  %s4 = inlined_call_operand.vmem [shape: f32[1,8,1], index: 4, kind: output, shape index: {2}]
  %5 = xla_tuple %s2, %s3, %s4
  %s6 = sld [smem:[#allocation0]]
  $region46: #{tpu_custom_call.1} parent=0
    _
  %s8 = ssub.s32 1, %s6
  %s9 = scalar_select 0, %s8, %s6
  $region1: #{tpu_custom_call.1} parent=0
    #allocation2 [shape = 'u8[2048]{0}', space=vmem, size = 0x800, scoped, tag = 'input window, operand 0, single buffered']
    #allocation3 [shape = 's32[1]{0}', space=sflag, size = 0x4, scoped, tag = 'scoped memory for tpu_custom_call.1']
    #allocation4 [shape = 's32[1]{0}', space=sflag, size = 0x4, scoped, tag = 'scoped memory for tpu_custom_call.1']
    #allocation5 [shape = 'u8[12288]{0}', space=vmem, size = 0x3000, scoped, tag = 'input window, operand 1, single buffered']
    #allocation6 [shape = 's32[1]{0}', space=sflag, size = 0x4, scoped, tag = 'scoped memory for tpu_custom_call.1']
    #allocation7 [shape = 'u8[2048]{0}', space=vmem, size = 0x800, scoped, tag = 'output window, operand 0, single buffered']
    %10 = vsyncpa [#allocation3], 0
    %11 = vsyncpa [#allocation6], 0
    %12 = vsyncpa [#allocation4], 0
    // Predicated region
    $region2: #{tpu_custom_call.1} parent=1 // pred_check
      _
    $region3: #{tpu_custom_call.1} parent=1 // pred_check_branch
      %14 = sbr.rel (0) target = $region5
    $region4: #{tpu_custom_call.1} parent=1 // pred_region
      %s16 = ssub.s32 64, 64
      %17 = vsyncadd [#allocation3], %s16
      %s19 = sshll.u32 [#allocation2], 4
      %s20 = int_to_ptr.vmem [resolvable:$true] %s19
      %22 = dma.hbm_to_vmem [thread:$0]  %s0, 64, %s20, [#allocation3]
    $region5: #{tpu_custom_call.1} parent=1 // pred_fallthru
      _
    // Predicated region
    $region6: #{tpu_custom_call.1} parent=1 // pred_check
      _
    $region7: #{tpu_custom_call.1} parent=1 // pred_check_branch
      %24 = sbr.rel (0) target = $region9
    $region8: #{tpu_custom_call.1} parent=1 // pred_region
      %s25 = sadd.s32 0, 0
      %s27 = ssub.s32 384, 384
      %28 = vsyncadd [#allocation6], %s27
      %s29 = smul.addr %s25, 64
      %s30 = scalar_lea.hbm %s1, %s29
      %s31 = sshll.u32 [#allocation5], 4
      %s32 = int_to_ptr.vmem [resolvable:$true] %s31
      %37 = dma.hbm_to_vmem [thread:$0]  %s30, 384, %s32, [#allocation6], 64, 64, 4
    $region9: #{tpu_custom_call.1} parent=1 // pred_fallthru
      _
    // Predicated region
    $region10: #{tpu_custom_call.1} parent=1 // pred_check
      _
    $region11: #{tpu_custom_call.1} parent=1 // pred_check_branch
      %39 = sbr.rel (0) target = $region13
    $region12: #{tpu_custom_call.1} parent=1 // pred_region
      %40 = dma.done [#allocation3], 64
    $region13: #{tpu_custom_call.1} parent=1 // pred_fallthru
      _
    // Predicated region
    $region14: #{tpu_custom_call.1} parent=1 // pred_check
      _
    $region15: #{tpu_custom_call.1} parent=1 // pred_check_branch
      %42 = sbr.rel (0) target = $region17
    $region16: #{tpu_custom_call.1} parent=1 // pred_region
      %43 = dma.done [#allocation6], 384
    $region17: #{tpu_custom_call.1} parent=1 // pred_fallthru
      _
    %s44 = sadd.s32 0, 0
    %s45 = sadd.s32 0, 0
    %p47 = scmp.eq.s32.totalorder 0, 0
    // Predicated region
    $region18: #{tpu_custom_call.1} parent=1 // pred_check
      %p48 = pneg %p47
    $region19: #{tpu_custom_call.1} parent=1 // pred_check_branch
      %50 = sbr.rel (%p48) target = $region21
    $region20: #{tpu_custom_call.1} parent=1 // pred_region
      %vm51 = vcmask 7168
      %52 = vst.msk [vmem:[%s3] sm:$0xff] %vm51, 0.0
      %53 = vst.msk [vmem:[%s4] sm:$0xff] %vm51, 0.0
    $region21: #{tpu_custom_call.1} parent=1 // pred_fallthru
      _
    %v54 = vld [vmem:[#allocation2] sm:$0xf]
    %v55 = vld [vmem:[#allocation5] sm:$0xf]
    %v56 = vld [vmem:[#allocation5 + $0x4] sm:$0xf]
    %v57 = vld [vmem:[#allocation5 + $0x8] sm:$0xf]
    %v58 = vld [vmem:[#allocation5 + $0xc] sm:$0xf]
    %v59 = vld [vmem:[#allocation5 + $0x10] sm:$0xf]
    %v60 = vld [vmem:[#allocation5 + $0x14] sm:$0xf]
    %v67 = vunpack.c.l.b16 %v55
    %v68 = vunpack.c.l.b16 %v56
    %v69 = vunpack.c.l.b16 %v57
    %v70 = vunpack.c.l.b16 %v58
    %v71 = vunpack.c.l.b16 %v59
    %v72 = vunpack.c.l.b16 %v60
    %v73 = vpack.c.b16 %v68, %v67
    %v74 = vpack.c.b16 %v70, %v69
    %v75 = vpack.c.b16 %v72, %v71
    %vm79 = vcmask 392192
    %v81 = vsel %vm79, %v54, 0
    %83 = vmatprep.subr.bf16.mxu0 0
    %84 = vmatpush1.bf16.msra.mxu0 %v73
    %85 = vmatprep.subr.bf16.mxu0 0
    %86 = vmatpush1.bf16.msra.mxu0 %v74
    %87 = vmatprep.subr.bf16.mxu0 0
    %88 = vmatpush1.bf16.msra.mxu0 %v75
    %89 = vmatprep.subr.bf16.mxu0 0
    %90 = vmatpush1.bf16.msra.mxu0 0
    %91 = vmatprep.subr.bf16.mxu0 0
    %92 = vmatpush1.bf16.msra.mxu0 0
    %93 = vmatprep.subr.bf16.mxu0 0
    %94 = vmatpush1.bf16.msra.mxu0 0
    %95 = vmatprep.subr.bf16.mxu0 0
    %96 = vmatpush1.bf16.msra.mxu0 0
    %97 = vmatprep.subr.bf16.mxu0 0
    %98 = vmatpush1.bf16.msra.mxu0 0
    %99 = vmatprep.subr.bf16.mxu0 0
    %100 = vmatpush1.bf16.msra.mxu0 0
    %101 = vmatprep.subr.bf16.mxu0 0
    %102 = vmatpush1.bf16.msra.mxu0 0
    %103 = vmatprep.subr.bf16.mxu0 0
    %104 = vmatpush1.bf16.msra.mxu0 0
    %105 = vmatprep.subr.bf16.mxu0 0
    %106 = vmatpush1.bf16.msra.mxu0 0
    %107 = vmatprep.subr.bf16.mxu0 0
    %108 = vmatpush1.bf16.msra.mxu0 0
    %109 = vmatprep.subr.bf16.mxu0 0
    %110 = vmatpush1.bf16.msra.mxu0 0
    %111 = vmatprep.subr.bf16.mxu0 0
    %112 = vmatpush1.bf16.msra.mxu0 0
    %113 = vmatprep.subr.bf16.mxu0 0
    %114 = vmatpush1.bf16.msra.mxu0 0
    %115 = vmatprep.mubr.bf16.mxu0 0
    %116 = vmatmul.mubr.bf16.gmra.mrb[0].mxu0 %v81
    %v117 = vpop.f32.mrb[0].mxu0
    %v118 = vadd.f32 0.0, %v117
    %v119 = vpop.f32.mrb[0].mxu0
    %v120 = vpop.f32.mrb[0].mxu0
    %v121 = vpop.f32.mrb[0].mxu0
    %122 = vdwg.mxu0
    %v123 = vpack.c.bf16 %v118, %v118
    %124 = vst [vmem:[#allocation7] sm:$0xf] %v123
    %v125 = vld [vmem:[%s3] sm:$0xff]
    %126 = vadd.xlane.f32.xlu0 %v118
    %v127 = vpop.xlane.xlu0 %126
    %v128 = vadd.f32 %v125, %v127
    %vm129 = vcmask 7168
    %130 = vst.msk [vmem:[%s3] sm:$0xff] %vm129, %v128
    %v131 = vld [vmem:[%s4] sm:$0xff]
    %v132 = vmul.f32 %v118, %v118
    %133 = vadd.xlane.f32.xlu0 %v132
    %v134 = vpop.xlane.xlu0 %133
    %v135 = vadd.f32 %v131, %v134
    %136 = vst.msk [vmem:[%s4] sm:$0xff] %vm129, %v135
    // Predicated region
    $region22: #{tpu_custom_call.1} parent=1 // pred_check
      _
    $region23: #{tpu_custom_call.1} parent=1 // pred_check_branch
      %138 = sbr.rel (0) target = $region25
    $region24: #{tpu_custom_call.1} parent=1 // pred_region
      %s139 = sadd.s32 0, 0
      %s141 = ssub.s32 64, 64
      %142 = vsyncadd [#allocation4], %s141
      %s143 = smul.addr %s139, 64
      %s144 = scalar_lea.hbm %s2, %s143
      %s146 = sshll.u32 [#allocation7], 4
      %s147 = int_to_ptr.vmem [resolvable:$true] %s146
      %149 = dma.vmem_to_hbm [thread:$0]  %s147, 64, %s144, [#allocation4]
    $region25: #{tpu_custom_call.1} parent=1 // pred_fallthru
      _
    // Predicated region
    $region26: #{tpu_custom_call.1} parent=1 // pred_check
      _
    $region27: #{tpu_custom_call.1} parent=1 // pred_check_branch
      %151 = sbr.rel (0) target = $region29
    $region28: #{tpu_custom_call.1} parent=1 // pred_region
      _
    $region29: #{tpu_custom_call.1} parent=1 // pred_fallthru
      _
    // Predicated region
    $region30: #{tpu_custom_call.1} parent=1 // pred_check
      _
    $region31: #{tpu_custom_call.1} parent=1 // pred_check_branch
      %153 = sbr.rel (0) target = $region33
    $region32: #{tpu_custom_call.1} parent=1 // pred_region
      _
    $region33: #{tpu_custom_call.1} parent=1 // pred_fallthru
      _
    // Predicated region
    $region34: #{tpu_custom_call.1} parent=1 // pred_check
      _
    $region35: #{tpu_custom_call.1} parent=1 // pred_check_branch
      %155 = sbr.rel (0) target = $region37
    $region36: #{tpu_custom_call.1} parent=1 // pred_region
      %156 = dma.done [#allocation4], 64
    $region37: #{tpu_custom_call.1} parent=1 // pred_fallthru
      _
    // Predicated region
    $region38: #{tpu_custom_call.1} parent=1 // pred_check
      _
    $region39: #{tpu_custom_call.1} parent=1 // pred_check_branch
      %158 = sbr.rel (0) target = $region41
    $region40: #{tpu_custom_call.1} parent=1 // pred_region
      _
    $region41: #{tpu_custom_call.1} parent=1 // pred_fallthru
      _
    // Predicated region
    $region42: #{tpu_custom_call.1} parent=1 // pred_check
      _
    $region43: #{tpu_custom_call.1} parent=1 // pred_check_branch
      %160 = sbr.rel (0) target = $region45
    $region44: #{tpu_custom_call.1} parent=1 // pred_region
      _
    $region45: #{tpu_custom_call.1} parent=1 // pred_fallthru
      _
    %161 = vsyncpa [#allocation3], 1
    %162 = vsyncpa [#allocation6], 1
    %163 = vsyncpa [#allocation4], 1

</llo_original>
